<compile_context>
chip_gen: v7x
topology: tpu7x:2x2x1
jax: 0.10.0
libtpu: 0.0.40
codegen_flags: <defaults>
</compile_context>

<pallas_src>
import functools

import jax
import jax.numpy as jnp
from jax.experimental import pallas as pl
from jax.experimental.pallas import tpu as pltpu


# Per-step VMEM footprint budget (inputs x 2 buffers + f32 temporaries +
# accumulator), per-step HBM byte target, and the explicit scoped-VMEM limit
# (48 MiB: headroom under v7x's 64 MiB physical, well under v5e/v6e's 128 MiB).
_VMEM_TILE_BUDGET = 16 * 1024 * 1024
_HBM_STEP_TARGET = 4 * 1024 * 1024
_VMEM_LIMIT_BYTES = 48 * 1024 * 1024

# Row tiles are multiples of 32 so int8 target blocks respect the packed
# (32, 128) sublane tiling (also covers bf16's (16, 128) and f32's (8, 128)).
_ROW_ALIGN = 32


def _round_up(x, m):
    return ((x + m - 1) // m) * m


def _row_grid(n_rows, cap_rows, two_way_split):
    """Pick (tile_rows, padded_rows, n_splits, inner_tiles) for a (rows, 128)
    spatial layout.  tile_rows is a multiple of 32; rows are padded up to a
    whole number of tiles (padding is masked out via sentinel targets)."""
    tile_r = max(_ROW_ALIGN,
                 (min(cap_rows, _round_up(n_rows, _ROW_ALIGN))
                  // _ROW_ALIGN) * _ROW_ALIGN)
    if two_way_split:
        # Keep tiles small enough that there are >= 2 of them, so the split
        # axis has extent 2 and v7x's second TensorCore stays busy.
        half = max(_ROW_ALIGN, _round_up((n_rows + 1) // 2, _ROW_ALIGN))
        tile_r = min(tile_r, half)
    n_tiles = -(-n_rows // tile_r)
    n_splits = 2 if (two_way_split and n_tiles >= 2) else 1
    if n_tiles % n_splits:
        n_tiles += n_splits - (n_tiles % n_splits)
    return tile_r, n_tiles * tile_r, n_splits, n_tiles // n_splits


# ----------------------------------------------------------------------------
# Multi-class path: softmax(dim=class) -> CrossEntropyLoss (per-(batch, split)
# partial sums accumulated in the resident output block, mean in the wrapper).
# ----------------------------------------------------------------------------
def _ce_kernel(x_ref, t_ref, o_ref, *, n_classes, apply_softmax):
    # x_ref: (1, C, TR, 128) logits (native dtype); t_ref: (1, TR, 128) int8/32
    # with padding sentinel -1 (matches no class); o_ref: (1, 8, 128) f32
    # partial sums, resident across the inner (arbitrary) grid axis.
    i = pl.program_id(2)

    @pl.when(i == 0)
    def _():
        o_ref[...] = jnp.zeros_like(o_ref)

    x = x_ref[0].astype(jnp.float32)                        # (C, TR, 128)
    if apply_softmax:
        m = jnp.max(x, axis=0, keepdims=True)               # VALU max over C
        e = jnp.exp(x - m)
        p = e * (1.0 / jnp.sum(e, axis=0, keepdims=True))   # 1 recip / pixel
        # nn.CrossEntropyLoss re-applies log_softmax internally; its inputs
        # here are probabilities in [0, 1], so the max-shift can be skipped.
        logp = p - jnp.log(jnp.sum(jnp.exp(p), axis=0, keepdims=True))
    else:
        xs = x - jnp.max(x, axis=0, keepdims=True)
        logp = xs - jnp.log(jnp.sum(jnp.exp(xs), axis=0, keepdims=True))

    # TODO(synk): nn.CrossEntropyLoss's ignore_index (-100) is not handled;
    # the original pipeline never emits ignore labels.
    t = t_ref[0].astype(jnp.int32)                           # (TR, 128)
    nll = jnp.zeros(t.shape, jnp.float32)
    for c in range(n_classes):            # static unroll: no (C,...) iota/mask
        nll = nll - jnp.where(t == c, logp[c], 0.0)

    # Dense (8,128) accumulate: fold sublane groups, add into resident output.
    o_ref[...] += jnp.sum(nll.reshape(-1, 8, 128), axis=0)[None]


def criterion_multiclass(logits, target, apply_softmax=True):
    """logits: (B, C, *spatial) float; target: (B, *spatial) int -> scalar."""
    B, C = logits.shape[0], logits.shape[1]
    HW = 1
    for d in logits.shape[2:]:
        HW *= d
    N = B * HW

    xb = jnp.dtype(logits.dtype).itemsize
    # TODO(synk): >127 classes fall back to int32 targets (sentinel still -1).
    t_dtype = jnp.int8 if C <= 127 else jnp.int32
    tb = jnp.dtype(t_dtype).itemsize

    hbm_row = 128 * (C * xb + tb)                 # HBM bytes per 128-lane row
    vmem_row = 128 * (2 * C * xb + 2 * tb + (3 * C + 4) * 4)  # + f32 temps
    cap_rows = max(_ROW_ALIGN, min(_VMEM_TILE_BUDGET // vmem_row,
                                   _HBM_STEP_TARGET // hbm_row))
    R = -(-HW // 128)
    tile_r, R_pad, n_splits, inner = _row_grid(R, cap_rows,
                                               two_way_split=(B == 1))
    HW_pad = R_pad * 128

    x = logits.reshape(B, C, HW)                  # free view: NCHW kept
    t = target.reshape(B, -1).astype(t_dtype)
    if HW_pad != HW:
        x = jnp.pad(x, ((0, 0), (0, 0), (0, HW_pad - HW)))
        t = jnp.pad(t, ((0, 0), (0, HW_pad - HW)), constant_values=-1)
    x = x.reshape(B, C, R_pad, 128)
    t = t.reshape(B, R_pad, 128)

    partials = pl.pallas_call(
        functools.partial(_ce_kernel, n_classes=C, apply_softmax=apply_softmax),
        out_shape=jax.ShapeDtypeStruct((B, 8 * n_splits, 128), jnp.float32),
        grid_spec=pltpu.PrefetchScalarGridSpec(
            num_scalar_prefetch=0,
            grid=(B, n_splits, inner),
            in_specs=[
                pl.BlockSpec((1, C, tile_r, 128),
                             lambda b, s, i: (b, 0, s * inner + i, 0)),
                pl.BlockSpec((1, tile_r, 128),
                             lambda b, s, i: (b, s * inner + i, 0)),
            ],
            out_specs=pl.BlockSpec((1, 8, 128), lambda b, s, i: (b, s, 0)),
        ),
        compiler_params=pltpu.CompilerParams(
            dimension_semantics=("parallel", "parallel", "arbitrary"),
            vmem_limit_bytes=_VMEM_LIMIT_BYTES),
    )(x, t)
    return jnp.sum(partials) / jnp.float32(N)


# ----------------------------------------------------------------------------
# Binary path: sigmoid -> BCELoss (mean reduction).
# ----------------------------------------------------------------------------
def _bce_kernel(x_ref, t_ref, o_ref, *, apply_sigmoid, masked):
    # x_ref: (1, TR, 128) logits; t_ref: (1, TR, 128) int8 (sentinel -1 when
    # masked); o_ref: (1, 8, 128) f32 resident partial-sum accumulator.
    i = pl.program_id(2)

    @pl.when(i == 0)
    def _():
        o_ref[...] = jnp.zeros_like(o_ref)

    x = x_ref[0].astype(jnp.float32)
    t_raw = t_ref[0].astype(jnp.int32)
    if masked:
        t = jnp.maximum(t_raw, 0).astype(jnp.float32)
    else:
        t = t_raw.astype(jnp.float32)

    if apply_sigmoid:
        # BCE(sigmoid(x), t) = softplus(x) - t*x : one exp + one log / element.
        # The log argument lies in (1, 2], so plain log loses no meaningful
        # precision; this intentionally skips nn.BCELoss's -100 log clamp
        # (documented deviation — numerically tighter for saturated logits).
        loss = jnp.maximum(x, 0.0) + jnp.log(1.0 + jnp.exp(-jnp.abs(x))) - t * x
    else:
        log_p = jnp.maximum(jnp.log(x), -100.0)       # matches BCELoss clamp
        log_1mp = jnp.maximum(jnp.log(1.0 - x), -100.0)
        loss = -(t * log_p + (1.0 - t) * log_1mp)

    if masked:
        loss = jnp.where(t_raw >= 0, loss, 0.0)

    o_ref[...] += jnp.sum(loss.reshape(-1, 8, 128), axis=0)[None]


def criterion_binary(logits, target, apply_sigmoid=True):
    """logits: (B, 1, *spatial) float; target: (B, *spatial) {0,1} -> scalar."""
    B = logits.shape[0]
    HW = 1
    for d in logits.shape[1:]:
        HW *= d
    N = B * HW

    xb = jnp.dtype(logits.dtype).itemsize
    hbm_row = 128 * (xb + 1)
    vmem_row = 128 * (2 * (xb + 1) + 5 * 4)       # + f32 temporaries
    cap_rows = max(_ROW_ALIGN, min(_VMEM_TILE_BUDGET // vmem_row,
                                   _HBM_STEP_TARGET // hbm_row))
    R = -(-HW // 128)
    tile_r, R_pad, n_splits, inner = _row_grid(R, cap_rows,
                                               two_way_split=(B == 1))
    HW_pad = R_pad * 128
    masked = HW_pad != HW

    x = logits.reshape(B, HW)                     # free view, native dtype
    t = target.reshape(B, -1).astype(jnp.int8)
    if masked:
        x = jnp.pad(x, ((0, 0), (0, HW_pad - HW)))
        t = jnp.pad(t, ((0, 0), (0, HW_pad - HW)), constant_values=-1)
    x = x.reshape(B, R_pad, 128)
    t = t.reshape(B, R_pad, 128)

    partials = pl.pallas_call(
        functools.partial(_bce_kernel, apply_sigmoid=apply_sigmoid,
                          masked=masked),
        out_shape=jax.ShapeDtypeStruct((B, 8 * n_splits, 128), jnp.float32),
        grid_spec=pltpu.PrefetchScalarGridSpec(
            num_scalar_prefetch=0,
            grid=(B, n_splits, inner),
            in_specs=[
                pl.BlockSpec((1, tile_r, 128),
                             lambda b, s, i: (b, s * inner + i, 0)),
                pl.BlockSpec((1, tile_r, 128),
                             lambda b, s, i: (b, s * inner + i, 0)),
            ],
            out_specs=pl.BlockSpec((1, 8, 128), lambda b, s, i: (b, s, 0)),
        ),
        compiler_params=pltpu.CompilerParams(
            dimension_semantics=("parallel", "parallel", "arbitrary"),
            vmem_limit_bytes=_VMEM_LIMIT_BYTES),
    )(x, t)
    return jnp.sum(partials) / jnp.float32(N)


# ----------------------------------------------------------------------------
# Criterion wrapper mirroring the nn.Module interface.
# ----------------------------------------------------------------------------
class Criterion:
    def __init__(self, num_classes: int):
        self.n_classes = num_classes

    def __call__(self, inputs, target, softmax=True):
        if self.n_classes == 1:
            return criterion_binary(inputs, target, apply_sigmoid=softmax)
        return criterion_multiclass(inputs, target, apply_softmax=softmax)


if __name__ == "__main__":
    key = jax.random.PRNGKey(0)
    keys = jax.random.split(key, 8)

    # --- Multi-class: B=2, C=4, 16x16 spatial (softmax=True and False) ------
    B, C, H, W = 2, 4, 16, 16
    logits = jax.random.normal(keys[0], (B, C, H, W), dtype=jnp.float32)
    target = jax.random.randint(keys[1], (B, H, W), 0, C, dtype=jnp.int32)
    crit_mc = Criterion(num_classes=C)

    loss_mc = jax.block_until_ready(crit_mc(logits, target, softmax=True))
    probs = jax.nn.softmax(logits, axis=1)
    logp_ref = jax.nn.log_softmax(probs, axis=1)
    ref_mc = jnp.mean(-jnp.take_along_axis(logp_ref, target[:, None], axis=1))
    assert jnp.allclose(loss_mc, ref_mc, atol=1e-5, rtol=1e-5), (loss_mc, ref_mc)

    loss_mc2 = jax.block_until_ready(crit_mc(logits, target, softmax=False))
    logp_ref2 = jax.nn.log_softmax(logits, axis=1)
    ref_mc2 = jnp.mean(-jnp.take_along_axis(logp_ref2, target[:, None], axis=1))
    assert jnp.allclose(loss_mc2, ref_mc2, atol=1e-5, rtol=1e-5), (loss_mc2, ref_mc2)

    # --- Multi-class: B=1, bf16, 128x128 (exercises the 2-way split axis) ----
    B1, C1, H1, W1 = 1, 3, 128, 128
    logits1 = jax.random.normal(keys[2], (B1, C1, H1, W1), dtype=jnp.bfloat16)
    target1 = jax.random.randint(keys[3], (B1, H1, W1), 0, C1, dtype=jnp.int32)
    loss1 = jax.block_until_ready(Criterion(C1)(logits1, target1, softmax=True))
    probs1 = jax.nn.softmax(logits1.astype(jnp.float32), axis=1)
    logp1 = jax.nn.log_softmax(probs1, axis=1)
    ref1 = jnp.mean(-jnp.take_along_axis(logp1, target1[:, None], axis=1))
    assert jnp.allclose(loss1, ref1, atol=1e-4, rtol=1e-4), (loss1, ref1)

    # --- Binary: B=2, 1 class, 16x16 (sigmoid path, aligned) -----------------
    logits_b = jax.random.normal(keys[4], (B, 1, H, W), dtype=jnp.float32)
    target_b = jax.random.randint(keys[5], (B, H, W), 0, 2, dtype=jnp.int32)
    loss_bin = jax.block_until_ready(Criterion(1)(logits_b, target_b, softmax=True))
    p_ref = jax.nn.sigmoid(logits_b.reshape(-1))
    t_ref = target_b.reshape(-1).astype(jnp.float32)
    ref_bce = -jnp.mean(t_ref * jnp.log(p_ref) + (1 - t_ref) * jnp.log(1 - p_ref))
    assert jnp.allclose(loss_bin, ref_bce, atol=1e-5, rtol=1e-5), (loss_bin, ref_bce)

    # --- Binary: probabilities in, softmax=False, ragged 10x10 (masked path) --
    probs_b = jax.nn.sigmoid(jax.random.normal(keys[6], (B, 1, 10, 10),
                                               dtype=jnp.float32))
    target_b2 = jax.random.randint(keys[7], (B, 10, 10), 0, 2, dtype=jnp.int32)
    loss_bin2 = jax.block_until_ready(Criterion(1)(probs_b, target_b2, softmax=False))
    p2 = probs_b.reshape(-1)
    t2 = target_b2.reshape(-1).astype(jnp.float32)
    ref_bce2 = -jnp.mean(t2 * jnp.log(p2) + (1 - t2) * jnp.log(1 - p2))
    assert jnp.allclose(loss_bin2, ref_bce2, atol=1e-5, rtol=1e-5), (loss_bin2, ref_bce2)

    print("KERNEL_OK")
</pallas_src>

<mosaic_0001>
module attributes {stable_mosaic.version = 11 : i64} {
  func.func @_ce_kernel(%arg0: i32, %arg1: i32, %arg2: i32, %arg3: memref<1x4x32x128xf32, #tpu.memory_space<vmem>>, %arg4: memref<1x32x128xi8, #tpu.memory_space<vmem>>, %arg5: memref<1x8x128xf32, #tpu.memory_space<vmem>>) attributes {dimension_semantics = [#tpu.dimension_semantics<parallel>, #tpu.dimension_semantics<parallel>, #tpu.dimension_semantics<arbitrary>], iteration_bounds = array<i64: 2, 1, 1>, scalar_prefetch = 0 : i64, scratch_operands = 0 : i64, tpu.core_type = #tpu.core_type<tc>, window_params = [{transform_indices = @transform_0, window_bounds = array<i64: 1, 4, 32, 128>}, {transform_indices = @transform_1, window_bounds = array<i64: 1, 32, 128>}, {transform_indices = @transform_2, window_bounds = array<i64: 1, 8, 128>}]} {
    %c0_i32 = arith.constant 0 : i32
    %0 = arith.cmpi eq, %arg2, %c0_i32 : i32
    %1 = arith.extui %0 : i1 to i32
    %c0_i32_0 = arith.constant 0 : i32
    %2 = arith.cmpi ne, %1, %c0_i32_0 : i32
    scf.if %2 {
      %cst_23 = arith.constant 0.000000e+00 : f32
      %60 = vector.broadcast %cst_23 : f32 to vector<1x8x128xf32>
      %c0_24 = arith.constant 0 : index
      %c0_25 = arith.constant 0 : index
      %c0_26 = arith.constant 0 : index
      %61 = vector.load %arg5[%c0_24, %c0_25, %c0_26] : memref<1x8x128xf32, #tpu.memory_space<vmem>>, vector<1x8x128xf32>
      tpu.vector_store %arg5[%c0_24, %c0_25, %c0_26], %60 {strides = array<i32>} : memref<1x8x128xf32, #tpu.memory_space<vmem>>, vector<1x8x128xf32>,
    } else {
    }
    %c0 = arith.constant 0 : index
    %c0_1 = arith.constant 0 : index
    %c0_2 = arith.constant 0 : index
    %c0_3 = arith.constant 0 : index
    %3 = vector.load %arg3[%c0, %c0_1, %c0_2, %c0_3] : memref<1x4x32x128xf32, #tpu.memory_space<vmem>>, vector<1x4x32x128xf32>
    %4 = vector.shape_cast %3 : vector<1x4x32x128xf32> to vector<4x32x128xf32>
    %cst = arith.constant dense<0xFF800000> : vector<32x128xf32>
    %5 = vector.multi_reduction <maximumf>, %4, %cst [0] : vector<4x32x128xf32> to vector<32x128xf32>
    %6 = vector.shape_cast %5 : vector<32x128xf32> to vector<1x32x128xf32>
    %7 = vector.broadcast %6 : vector<1x32x128xf32> to vector<4x32x128xf32>
    %8 = arith.subf %4, %7 : vector<4x32x128xf32>
    %9 = math.exp %8 : vector<4x32x128xf32>
    %cst_4 = arith.constant dense<0.000000e+00> : vector<32x128xf32>
    %10 = vector.multi_reduction <add>, %9, %cst_4 [0] : vector<4x32x128xf32> to vector<32x128xf32>
    %11 = vector.shape_cast %10 : vector<32x128xf32> to vector<1x32x128xf32>
    %cst_5 = arith.constant 1.000000e+00 : f32
    %12 = vector.broadcast %cst_5 : f32 to vector<1x32x128xf32>
    %13 = arith.divf %12, %11 : vector<1x32x128xf32>
    %14 = vector.broadcast %13 : vector<1x32x128xf32> to vector<4x32x128xf32>
    %15 = arith.mulf %9, %14 : vector<4x32x128xf32>
    %16 = math.exp %15 : vector<4x32x128xf32>
    %cst_6 = arith.constant dense<0.000000e+00> : vector<32x128xf32>
    %17 = vector.multi_reduction <add>, %16, %cst_6 [0] : vector<4x32x128xf32> to vector<32x128xf32>
    %18 = vector.shape_cast %17 : vector<32x128xf32> to vector<1x32x128xf32>
    %19 = math.log %18 : vector<1x32x128xf32>
    %20 = vector.broadcast %19 : vector<1x32x128xf32> to vector<4x32x128xf32>
    %21 = arith.subf %15, %20 : vector<4x32x128xf32>
    %c0_7 = arith.constant 0 : index
    %c0_8 = arith.constant 0 : index
    %c0_9 = arith.constant 0 : index
    %22 = vector.load %arg4[%c0_7, %c0_8, %c0_9] : memref<1x32x128xi8, #tpu.memory_space<vmem>>, vector<1x32x128xi8>
    %23 = vector.shape_cast %22 : vector<1x32x128xi8> to vector<32x128xi8>
    %24 = arith.extsi %23 : vector<32x128xi8> to vector<32x128xi32>
    %cst_10 = arith.constant 0.000000e+00 : f32
    %25 = vector.broadcast %cst_10 : f32 to vector<32x128xf32>
    %c0_i32_11 = arith.constant 0 : i32
    %26 = vector.broadcast %c0_i32_11 : i32 to vector<32x128xi32>
    %27 = arith.cmpi eq, %24, %26 : vector<32x128xi32>
    %28 = vector.extract_strided_slice %21 {offsets = [0, 0, 0], sizes = [1, 32, 128], strides = [1, 1, 1]} : vector<4x32x128xf32> to vector<1x32x128xf32>
    %29 = vector.shape_cast %28 : vector<1x32x128xf32> to vector<32x128xf32>
    %cst_12 = arith.constant 0.000000e+00 : f32
    %30 = vector.broadcast %cst_12 : f32 to vector<32x128xf32>
    %31 = arith.select %27, %29, %30 : vector<32x128xi1>, vector<32x128xf32>
    %32 = arith.subf %25, %31 : vector<32x128xf32>
    %c1_i32 = arith.constant 1 : i32
    %33 = vector.broadcast %c1_i32 : i32 to vector<32x128xi32>
    %34 = arith.cmpi eq, %24, %33 : vector<32x128xi32>
    %35 = vector.extract_strided_slice %21 {offsets = [1, 0, 0], sizes = [1, 32, 128], strides = [1, 1, 1]} : vector<4x32x128xf32> to vector<1x32x128xf32>
    %36 = vector.shape_cast %35 : vector<1x32x128xf32> to vector<32x128xf32>
    %cst_13 = arith.constant 0.000000e+00 : f32
    %37 = vector.broadcast %cst_13 : f32 to vector<32x128xf32>
    %38 = arith.select %34, %36, %37 : vector<32x128xi1>, vector<32x128xf32>
    %39 = arith.subf %32, %38 : vector<32x128xf32>
    %c2_i32 = arith.constant 2 : i32
    %40 = vector.broadcast %c2_i32 : i32 to vector<32x128xi32>
    %41 = arith.cmpi eq, %24, %40 : vector<32x128xi32>
    %42 = vector.extract_strided_slice %21 {offsets = [2, 0, 0], sizes = [1, 32, 128], strides = [1, 1, 1]} : vector<4x32x128xf32> to vector<1x32x128xf32>
    %43 = vector.shape_cast %42 : vector<1x32x128xf32> to vector<32x128xf32>
    %cst_14 = arith.constant 0.000000e+00 : f32
    %44 = vector.broadcast %cst_14 : f32 to vector<32x128xf32>
    %45 = arith.select %41, %43, %44 : vector<32x128xi1>, vector<32x128xf32>
    %46 = arith.subf %39, %45 : vector<32x128xf32>
    %c3_i32 = arith.constant 3 : i32
    %47 = vector.broadcast %c3_i32 : i32 to vector<32x128xi32>
    %48 = arith.cmpi eq, %24, %47 : vector<32x128xi32>
    %49 = vector.extract_strided_slice %21 {offsets = [3, 0, 0], sizes = [1, 32, 128], strides = [1, 1, 1]} : vector<4x32x128xf32> to vector<1x32x128xf32>
    %50 = vector.shape_cast %49 : vector<1x32x128xf32> to vector<32x128xf32>
    %cst_15 = arith.constant 0.000000e+00 : f32
    %51 = vector.broadcast %cst_15 : f32 to vector<32x128xf32>
    %52 = arith.select %48, %50, %51 : vector<32x128xi1>, vector<32x128xf32>
    %53 = arith.subf %46, %52 : vector<32x128xf32>
    %c0_16 = arith.constant 0 : index
    %c0_17 = arith.constant 0 : index
    %c0_18 = arith.constant 0 : index
    %54 = vector.load %arg5[%c0_16, %c0_17, %c0_18] : memref<1x8x128xf32, #tpu.memory_space<vmem>>, vector<1x8x128xf32>
    %55 = vector.shape_cast %53 : vector<32x128xf32> to vector<4x8x128xf32>
    %cst_19 = arith.constant dense<0.000000e+00> : vector<8x128xf32>
    %56 = vector.multi_reduction <add>, %55, %cst_19 [0] : vector<4x8x128xf32> to vector<8x128xf32>
    %57 = vector.shape_cast %56 : vector<8x128xf32> to vector<1x8x128xf32>
    %58 = arith.addf %54, %57 : vector<1x8x128xf32>
    %c0_20 = arith.constant 0 : index
    %c0_21 = arith.constant 0 : index
    %c0_22 = arith.constant 0 : index
    %59 = vector.load %arg5[%c0_20, %c0_21, %c0_22] : memref<1x8x128xf32, #tpu.memory_space<vmem>>, vector<1x8x128xf32>
    tpu.vector_store %arg5[%c0_20, %c0_21, %c0_22], %58 {strides = array<i32>} : memref<1x8x128xf32, #tpu.memory_space<vmem>>, vector<1x8x128xf32>,
    return
  }
  func.func @transform_0(%arg0: i32, %arg1: i32, %arg2: i32) -> (i32, i32, i32, i32) {
    %c1_i32 = arith.constant 1 : i32
    %0 = arith.muli %arg1, %c1_i32 : i32
    %1 = arith.addi %0, %arg2 : i32
    %c0_i32 = arith.constant 0 : i32
    %c0_i32_0 = arith.constant 0 : i32
    %c0_i32_1 = arith.constant 0 : i32
    return %arg0, %c0_i32, %1, %c0_i32_0 : i32, i32, i32, i32
  }
  func.func @transform_1(%arg0: i32, %arg1: i32, %arg2: i32) -> (i32, i32, i32) {
    %c1_i32 = arith.constant 1 : i32
    %0 = arith.muli %arg1, %c1_i32 : i32
    %1 = arith.addi %0, %arg2 : i32
    %c0_i32 = arith.constant 0 : i32
    %c0_i32_0 = arith.constant 0 : i32
    return %arg0, %1, %c0_i32 : i32, i32, i32
  }
  func.func @transform_2(%arg0: i32, %arg1: i32, %arg2: i32) -> (i32, i32, i32) {
    %c0_i32 = arith.constant 0 : i32
    %c0_i32_0 = arith.constant 0 : i32
    return %arg0, %arg1, %c0_i32 : i32, i32, i32
  }
}

</mosaic_0001>

<llo_original>
// kernel: tpu_custom_call.1
$region0: #{tpu_custom_call.1}
  #allocation0 [shape = 'u32[]', space=smem, size = 0x4, offset = 0x4, fixed_abs, tag = 'smem constant byte address 0x4 - core index']
  #allocation1 [shape = 'u32[144,128]{1,0:T(1,128)}', space=vmem, size = 0x12000, scoped, tag = 'internal scratch']
  %s0 = inlined_call_operand.hbm [shape: f32[2,4,32,128], index: 0, kind: input, shape index: {}]
  %s1 = inlined_call_operand.hbm [shape: s8[2,32,128], index: 1, kind: input, shape index: {}]
  %s2 = inlined_call_operand.hbm [shape: f32[2,8,128], index: 2, kind: output, shape index: {}]
  %s3 = sld [smem:[#allocation0]]
  $region53: #{tpu_custom_call.1} parent=0
    _
  %s5 = ssub.s32 1, %s3
  %s6 = scalar_select 0, %s5, %s3
  $region1: #{tpu_custom_call.1} parent=0
    #allocation2 [shape = 'u8[131072]{0}', space=vmem, size = 0x20000, scoped, tag = 'input window, operand 0']
    #allocation3 [shape = 's32[2]{0}', space=sflag, size = 0x8, scoped, tag = 'scoped memory for tpu_custom_call.1']
    #allocation4 [shape = 's32[2]{0}', space=sflag, size = 0x8, scoped, tag = 'scoped memory for tpu_custom_call.1']
    #allocation5 [shape = 'u8[8192]{0}', space=vmem, size = 0x2000, scoped, tag = 'input window, operand 1']
    #allocation6 [shape = 's32[2]{0}', space=sflag, size = 0x8, scoped, tag = 'scoped memory for tpu_custom_call.1']
    #allocation7 [shape = 'u8[8192]{0}', space=vmem, size = 0x2000, scoped, tag = 'output window, operand 0']
    %7 = vsyncpa [#allocation3], 0
    %s8 = scalar_lea.sflag [#allocation3], 1
    %9 = vsyncpa %s8, 0
    %10 = vsyncpa [#allocation6], 0
    %s11 = scalar_lea.sflag [#allocation6], 1
    %12 = vsyncpa %s11, 0
    %13 = vsyncpa [#allocation4], 0
    %s14 = scalar_lea.sflag [#allocation4], 1
    %15 = vsyncpa %s14, 0
    loop: start=0, step=1, limit=4
    $region2: #{tpu_custom_call.1} parent=1 // loop_pre_header
      _
    $region3: #{tpu_custom_call.1} parent=1 // loop_header
      %s17 = sphi 0, %s21
      %p18 = scmp.ge.s32.totalorder %s17, 4
      %s24 = sphi 0, %s43
      %s25 = sphi 0, %s39
      %s26 = sphi 0, %s35
      %s27 = sphi 0, %s24
      %s28 = sphi 0, %s25
      %s29 = sphi 0, %s26
      %s30 = sphi 0, %s27
      %s31 = sphi 0, %s28
      %s32 = sphi 0, %s29
      %s50 = sphi 0, %s52
      %s53 = sphi 0, %s50
      %s54 = sphi 0, %s53
      %s70 = sphi 0, %s54
      %s80 = sphi 0, %s82
      %s83 = sphi 0, %s80
      %s84 = sphi 0, %s83
      %s100 = sphi 0, %s84
      %s108 = sphi 0, %s110
      %s111 = sphi 0, %s108
      %s112 = sphi 0, %s111
      %s128 = sphi 0, %s112
    $region4: #{tpu_custom_call.1} parent=1 // loop_header_branch
      %20 = sbr.rel (%p18) target = $region8
    $region5: #{tpu_custom_call.1} parent=1 // loop_body
      %s22 = ssub.s32 %s17, 1
      %s23 = ssub.s32 %s17, 2
      %s33 = sadd.s32 1, %s26
      %p34 = scmp.ge.s32.totalorder %s33, 1
      %s35 = scalar_select %p34, 0, %s33
      %s36 = sadd.s32 1, %s25
      %s37 = scalar_select %p34, %s36, %s25
      %p38 = scmp.ge.s32.totalorder %s37, 1
      %s39 = scalar_select %p38, 0, %s37
      %s40 = sadd.s32 1, %s24
      %s41 = scalar_select %p38, %s40, %s24
      %p42 = scmp.ge.s32.totalorder %s41, 2
      %s43 = scalar_select %p42, 0, %s41
      %s44 = sadd.s32 %s25, %s26
      %s45 = sadd.s32 %s39, %s35
      %s46 = ssub.s32 %s24, %s43
      %s47 = ssub.s32 %s44, %s45
      %s48 = sor.u32 %s46, %s47
      %p49 = scmp.eq.s32.totalorder %s48, 0
      %s51 = sadd.s32 %s50, 1
      %s52 = scalar_select %p49, %s50, %s51
      %p55 = pneg %p49
      %p56 = scmp.eq.s32.totalorder %s17, 1
      %p57 = por %p55, %p56
      %p58 = scmp.ne.s32.totalorder %s50, %s53
      %p59 = scmp.eq.s32.totalorder %s17, 0
      %p60 = por %p58, %p59
      %p61 = scmp.ne.s32.totalorder %s50, %s53
      %p62 = scmp.eq.s32.totalorder %s22, 1
      %p63 = por %p61, %p62
      %p64 = scmp.ne.s32.totalorder %s53, %s54
      %p65 = scmp.eq.s32.totalorder %s22, 0
      %p66 = por %p64, %p65
      %p67 = scmp.ne.s32.totalorder %s53, %s54
      %p68 = scmp.eq.s32.totalorder %s23, 1
      %p69 = por %p67, %p68
      %p71 = scmp.ne.s32.totalorder %s54, %s70
      %p72 = scmp.eq.s32.totalorder %s23, 0
      %p73 = por %p71, %p72
      %s74 = sadd.s32 %s25, %s26
      %s75 = sadd.s32 %s39, %s35
      %s76 = ssub.s32 %s24, %s43
      %s77 = ssub.s32 %s74, %s75
      %s78 = sor.u32 %s76, %s77
      %p79 = scmp.eq.s32.totalorder %s78, 0
      %s81 = sadd.s32 %s80, 1
      %s82 = scalar_select %p79, %s80, %s81
      %p85 = pneg %p79
      %p86 = scmp.eq.s32.totalorder %s17, 1
      %p87 = por %p85, %p86
      %p88 = scmp.ne.s32.totalorder %s80, %s83
      %p89 = scmp.eq.s32.totalorder %s17, 0
      %p90 = por %p88, %p89
      %p91 = scmp.ne.s32.totalorder %s80, %s83
      %p92 = scmp.eq.s32.totalorder %s22, 1
      %p93 = por %p91, %p92
      %p94 = scmp.ne.s32.totalorder %s83, %s84
      %p95 = scmp.eq.s32.totalorder %s22, 0
      %p96 = por %p94, %p95
      %p97 = scmp.ne.s32.totalorder %s83, %s84
      %p98 = scmp.eq.s32.totalorder %s23, 1
      %p99 = por %p97, %p98
      %p101 = scmp.ne.s32.totalorder %s84, %s100
      %p102 = scmp.eq.s32.totalorder %s23, 0
      %p103 = por %p101, %p102
      %s104 = ssub.s32 %s24, %s43
      %s105 = ssub.s32 %s25, %s39
      %s106 = sor.u32 %s104, %s105
      %p107 = scmp.eq.s32.totalorder %s106, 0
      %s109 = sadd.s32 %s108, 1
      %s110 = scalar_select %p107, %s108, %s109
      %p113 = pneg %p107
      %p114 = scmp.eq.s32.totalorder %s17, 1
      %p115 = por %p113, %p114
      %p116 = scmp.ne.s32.totalorder %s108, %s111
      %p117 = scmp.eq.s32.totalorder %s17, 0
      %p118 = por %p116, %p117
      %p119 = scmp.ne.s32.totalorder %s108, %s111
      %p120 = scmp.eq.s32.totalorder %s22, 1
      %p121 = por %p119, %p120
      %p122 = scmp.ne.s32.totalorder %s111, %s112
      %p123 = scmp.eq.s32.totalorder %s22, 0
      %p124 = por %p122, %p123
      %p125 = scmp.ne.s32.totalorder %s111, %s112
      %p126 = scmp.eq.s32.totalorder %s23, 1
      %p127 = por %p125, %p126
      %p129 = scmp.ne.s32.totalorder %s112, %s128
      %p130 = scmp.eq.s32.totalorder %s23, 0
      %p131 = por %p129, %p130
      %p132 = scmp.le.s32.totalorder 1, %s17
      %p133 = scmp.lt.s32.totalorder %s17, 3
      %p134 = pnand %p132, %p133
      %p135 = pneg %p134
      // Predicated region
      $region9: #{tpu_custom_call.1} parent=5 // pred_check
        _
      $region10: #{tpu_custom_call.1} parent=5 // pred_check_branch
        %137 = sbr.rel (%p134) target = $region12
      $region11: #{tpu_custom_call.1} parent=5 // pred_region
        %s138 = ssub.s32 %s17, 1
      $region12: #{tpu_custom_call.1} parent=5 // pred_fallthru
        _
      %p139 = scmp.lt.s32.totalorder %s17, 2
      // Predicated region
      $region13: #{tpu_custom_call.1} parent=5 // pred_check
        %p140 = pneg %p139
      $region14: #{tpu_custom_call.1} parent=5 // pred_check_branch
        %142 = sbr.rel (%p140) target = $region16
      $region15: #{tpu_custom_call.1} parent=5 // pred_region
        // Predicated region
        $region17: #{tpu_custom_call.1} parent=15 // pred_check
          %p143 = pneg %p60
        $region18: #{tpu_custom_call.1} parent=15 // pred_check_branch
          %145 = sbr.rel (%p143) target = $region20
        $region19: #{tpu_custom_call.1} parent=15 // pred_region
          %s146 = sand.u32 %s50, 1
          %s147 = scalar_lea.sflag [#allocation3], %s146
          %s148 = sand.u32 %s50, 1
          %s149 = smul.addr %s148, 128
          %s150 = scalar_lea.vmem [#allocation2], %s149
          %s151 = sadd.s32 %s25, %s26
          %s152 = smul.u32 4, %s151
          %s154 = ssub.s32 2048, 2048
          %155 = vsyncadd %s147, %s154
          %s156 = smul.addr %s24, 16
          %s157 = sadd.s32 %s152, %s156
          %s158 = smul.addr %s157, 128
          %s159 = scalar_lea.hbm %s0, %s158
          %s160 = sshll.u32 %s150, 4
          %s161 = int_to_ptr.vmem [resolvable:$true] %s160
          %166 = dma.hbm_to_vmem [thread:$0]  %s159, 2048, %s161, %s147, 128, 128, 8
        $region20: #{tpu_custom_call.1} parent=15 // pred_fallthru
          _
        // Predicated region
        $region21: #{tpu_custom_call.1} parent=15 // pred_check
          %p167 = pneg %p90
        $region22: #{tpu_custom_call.1} parent=15 // pred_check_branch
          %169 = sbr.rel (%p167) target = $region24
        $region23: #{tpu_custom_call.1} parent=15 // pred_region
          %s170 = sand.u32 %s80, 1
          %s171 = scalar_lea.sflag [#allocation6], %s170
          %s172 = sand.u32 %s80, 1
          %s173 = smul.addr %s172, 8
          %s174 = scalar_lea.vmem [#allocation5], %s173
          %s175 = sadd.s32 %s25, %s26
          %s177 = ssub.s32 128, 128
          %178 = vsyncadd %s171, %s177
          %s179 = sadd.s32 %s175, %s24
          %s180 = smul.addr %s179, 128
          %s181 = scalar_lea.hbm %s1, %s180
          %s183 = sshll.u32 %s174, 4
          %s184 = int_to_ptr.vmem [resolvable:$true] %s183
          %186 = dma.hbm_to_vmem [thread:$0]  %s181, 128, %s184, %s171
        $region24: #{tpu_custom_call.1} parent=15 // pred_fallthru
          _
      $region16: #{tpu_custom_call.1} parent=5 // pred_fallthru
        _
      %p187 = scmp.le.s32.totalorder 1, %s17
      %p188 = scmp.lt.s32.totalorder %s17, 3
      %p189 = pnand %p187, %p188
      %p190 = pneg %p189
      // Predicated region
      $region25: #{tpu_custom_call.1} parent=5 // pred_check
        _
      $region26: #{tpu_custom_call.1} parent=5 // pred_check_branch
        %192 = sbr.rel (%p189) target = $region28
      $region27: #{tpu_custom_call.1} parent=5 // pred_region
        %s193 = ssub.s32 %s17, 1
        %s194 = sand.u32 %s53, 1
        %s195 = scalar_lea.sflag [#allocation3], %s194
        %s196 = sand.u32 %s53, 1
        %s197 = smul.addr %s196, 128
        %s198 = scalar_lea.vmem [#allocation2], %s197
        // Predicated region
        $region29: #{tpu_custom_call.1} parent=27 // pred_check
          %p199 = pneg %p66
        $region30: #{tpu_custom_call.1} parent=27 // pred_check_branch
          %201 = sbr.rel (%p199) target = $region32
        $region31: #{tpu_custom_call.1} parent=27 // pred_region
          %202 = dma.done %s195, 2048
        $region32: #{tpu_custom_call.1} parent=27 // pred_fallthru
          _
        %s203 = sand.u32 %s83, 1
        %s204 = scalar_lea.sflag [#allocation6], %s203
        %s205 = sand.u32 %s83, 1
        %s206 = smul.addr %s205, 8
        %s207 = scalar_lea.vmem [#allocation5], %s206
        // Predicated region
        $region33: #{tpu_custom_call.1} parent=27 // pred_check
          %p208 = pneg %p96
        $region34: #{tpu_custom_call.1} parent=27 // pred_check_branch
          %210 = sbr.rel (%p208) target = $region36
        $region35: #{tpu_custom_call.1} parent=27 // pred_region
          %211 = dma.done %s204, 128
        $region36: #{tpu_custom_call.1} parent=27 // pred_fallthru
          _
        %s212 = sand.u32 %s53, 1
        %s213 = scalar_lea.sflag [#allocation3], %s212
        %s214 = sand.u32 %s53, 1
        %s215 = smul.addr %s214, 128
        %s216 = scalar_lea.vmem [#allocation2], %s215
        %p217 = pneg %p66
        %p218 = pneg %p63
        %s219 = sand.u32 %s83, 1
        %s220 = scalar_lea.sflag [#allocation6], %s219
        %s221 = sand.u32 %s83, 1
        %s222 = smul.addr %s221, 8
        %s223 = scalar_lea.vmem [#allocation5], %s222
        %p224 = pneg %p96
        %p225 = pneg %p93
        %p226 = pneg %p124
        %p227 = pneg %p121
        %s228 = sand.u32 %s111, 1
        %s229 = scalar_lea.sflag [#allocation4], %s228
        %s230 = sand.u32 %s111, 1
        %s231 = smul.addr %s230, 8
        %s232 = scalar_lea.vmem [#allocation7], %s231
        %s233 = sadd.s32 %s28, %s29
        %s234 = smul.u32 4, %s233
        %s235 = sadd.s32 %s28, %s29
        %p236 = scmp.eq.s32.totalorder %s29, 0
        // Predicated region
        $region37: #{tpu_custom_call.1} parent=27 // pred_check
          %p237 = pneg %p236
        $region38: #{tpu_custom_call.1} parent=27 // pred_check_branch
          %239 = sbr.rel (%p237) target = $region40
        $region39: #{tpu_custom_call.1} parent=27 // pred_region
          %240 = vst [vmem:[%s232] sm:$0xff] 0.0
        $region40: #{tpu_custom_call.1} parent=27 // pred_fallthru
          _
        %v241 = vld [vmem:[%s198] sm:$0xff]
        %v242 = vld [vmem:[%s198 + $0x8] sm:$0xff]
        %v243 = vld [vmem:[%s198 + $0x10] sm:$0xff]
        %v244 = vld [vmem:[%s198 + $0x18] sm:$0xff]
        %v245 = vld [vmem:[%s198 + $0x20] sm:$0xff]
        %v246 = vld [vmem:[%s198 + $0x28] sm:$0xff]
        %v247 = vld [vmem:[%s198 + $0x30] sm:$0xff]
        %v248 = vld [vmem:[%s198 + $0x38] sm:$0xff]
        %v249 = vld [vmem:[%s198 + $0x40] sm:$0xff]
        %v250 = vld [vmem:[%s198 + $0x48] sm:$0xff]
        %v251 = vld [vmem:[%s198 + $0x50] sm:$0xff]
        %v252 = vld [vmem:[%s198 + $0x58] sm:$0xff]
        %v253 = vld [vmem:[%s198 + $0x60] sm:$0xff]
        %v254 = vld [vmem:[%s198 + $0x68] sm:$0xff]
        %v255 = vld [vmem:[%s198 + $0x70] sm:$0xff]
        %v256 = vld [vmem:[%s198 + $0x78] sm:$0xff]
        %v257 = vmax.f32 %v241, %v245
        %v258 = vmax.f32 %v257, %v249
        %v259 = vmax.f32 %v258, %v253
        %v260 = vmax.f32 %v242, %v246
        %v261 = vmax.f32 %v260, %v250
        %v262 = vmax.f32 %v261, %v254
        %v263 = vmax.f32 %v243, %v247
        %v264 = vmax.f32 %v263, %v251
        %v265 = vmax.f32 %v264, %v255
        %v266 = vmax.f32 %v244, %v248
        %v267 = vmax.f32 %v266, %v252
        %v268 = vmax.f32 %v267, %v256
        %v269 = vsub.f32 %v241, %v259
        %v270 = vsub.f32 %v242, %v262
        %v271 = vsub.f32 %v243, %v265
        %v272 = vsub.f32 %v244, %v268
        %v273 = vsub.f32 %v245, %v259
        %v274 = vsub.f32 %v246, %v262
        %v275 = vsub.f32 %v247, %v265
        %v276 = vsub.f32 %v248, %v268
        %v277 = vsub.f32 %v249, %v259
        %v278 = vsub.f32 %v250, %v262
        %v279 = vsub.f32 %v251, %v265
        %v280 = vsub.f32 %v252, %v268
        %v281 = vsub.f32 %v253, %v259
        %v282 = vsub.f32 %v254, %v262
        %v283 = vsub.f32 %v255, %v265
        %v284 = vsub.f32 %v256, %v268
        %v285 = vmul.f32 %v269, 1.442695
        %v286 = vpow.pop %v285
        %v287 = vmul.f32 %v270, 1.442695
        %v288 = vpow.pop %v287
        %v289 = vmul.f32 %v271, 1.442695
        %v290 = vpow.pop %v289
        %v291 = vmul.f32 %v272, 1.442695
        %v292 = vpow.pop %v291
        %v293 = vmul.f32 %v273, 1.442695
        %v294 = vpow.pop %v293
        %v295 = vmul.f32 %v274, 1.442695
        %v296 = vpow.pop %v295
        %v297 = vmul.f32 %v275, 1.442695
        %v298 = vpow.pop %v297
        %v299 = vmul.f32 %v276, 1.442695
        %v300 = vpow.pop %v299
        %v301 = vmul.f32 %v277, 1.442695
        %v302 = vpow.pop %v301
        %v303 = vmul.f32 %v278, 1.442695
        %v304 = vpow.pop %v303
        %v305 = vmul.f32 %v279, 1.442695
        %v306 = vpow.pop %v305
        %v307 = vmul.f32 %v280, 1.442695
        %v308 = vpow.pop %v307
        %v309 = vmul.f32 %v281, 1.442695
        %v310 = vpow.pop %v309
        %v311 = vmul.f32 %v282, 1.442695
        %v312 = vpow.pop %v311
        %v313 = vmul.f32 %v283, 1.442695
        %v314 = vpow.pop %v313
        %v315 = vmul.f32 %v284, 1.442695
        %v316 = vpow.pop %v315
        %v317 = vadd.f32 %v286, %v294
        %v318 = vadd.f32 %v317, %v302
        %v319 = vadd.f32 %v318, %v310
        %v320 = vadd.f32 %v288, %v296
        %v321 = vadd.f32 %v320, %v304
        %v322 = vadd.f32 %v321, %v312
        %v323 = vadd.f32 %v290, %v298
        %v324 = vadd.f32 %v323, %v306
        %v325 = vadd.f32 %v324, %v314
        %v326 = vadd.f32 %v292, %v300
        %v327 = vadd.f32 %v326, %v308
        %v328 = vadd.f32 %v327, %v316
        %v329 = vrcp.pop %v319
        %v330 = vmul.f32 1.0, %v329
        %v331 = vrcp.pop %v322
        %v332 = vmul.f32 1.0, %v331
        %v333 = vrcp.pop %v325
        %v334 = vmul.f32 1.0, %v333
        %v335 = vrcp.pop %v328
        %v336 = vmul.f32 1.0, %v335
        %v337 = vmul.f32 %v286, %v330
        %v338 = vmul.f32 %v288, %v332
        %v339 = vmul.f32 %v290, %v334
        %v340 = vmul.f32 %v292, %v336
        %v341 = vmul.f32 %v294, %v330
        %v342 = vmul.f32 %v296, %v332
        %v343 = vmul.f32 %v298, %v334
        %v344 = vmul.f32 %v300, %v336
        %v345 = vmul.f32 %v302, %v330
        %v346 = vmul.f32 %v304, %v332
        %v347 = vmul.f32 %v306, %v334
        %v348 = vmul.f32 %v308, %v336
        %v349 = vmul.f32 %v310, %v330
        %v350 = vmul.f32 %v312, %v332
        %v351 = vmul.f32 %v314, %v334
        %v352 = vmul.f32 %v316, %v336
        %v353 = vmul.f32 %v337, 1.442695
        %v354 = vpow.pop %v353
        %v355 = vmul.f32 %v338, 1.442695
        %v356 = vpow.pop %v355
        %v357 = vmul.f32 %v339, 1.442695
        %v358 = vpow.pop %v357
        %v359 = vmul.f32 %v340, 1.442695
        %v360 = vpow.pop %v359
        %v361 = vmul.f32 %v341, 1.442695
        %v362 = vpow.pop %v361
        %v363 = vmul.f32 %v342, 1.442695
        %v364 = vpow.pop %v363
        %v365 = vmul.f32 %v343, 1.442695
        %v366 = vpow.pop %v365
        %v367 = vmul.f32 %v344, 1.442695
        %v368 = vpow.pop %v367
        %v369 = vmul.f32 %v345, 1.442695
        %v370 = vpow.pop %v369
        %v371 = vmul.f32 %v346, 1.442695
        %v372 = vpow.pop %v371
        %v373 = vmul.f32 %v347, 1.442695
        %v374 = vpow.pop %v373
        %v375 = vmul.f32 %v348, 1.442695
        %v376 = vpow.pop %v375
        %v377 = vmul.f32 %v349, 1.442695
        %v378 = vpow.pop %v377
        %v379 = vmul.f32 %v350, 1.442695
        %v380 = vpow.pop %v379
        %v381 = vmul.f32 %v351, 1.442695
        %v382 = vpow.pop %v381
        %v383 = vmul.f32 %v352, 1.442695
        %v384 = vpow.pop %v383
        %v385 = vadd.f32 %v354, %v362
        %v386 = vadd.f32 %v385, %v370
        %v387 = vadd.f32 %v386, %v378
        %v388 = vadd.f32 %v356, %v364
        %v389 = vadd.f32 %v388, %v372
        %v390 = vadd.f32 %v389, %v380
        %v391 = vadd.f32 %v358, %v366
        %v392 = vadd.f32 %v391, %v374
        %v393 = vadd.f32 %v392, %v382
        %v394 = vadd.f32 %v360, %v368
        %v395 = vadd.f32 %v394, %v376
        %v396 = vadd.f32 %v395, %v384
        %v397 = vlog2.pop %v387
        %v398 = vmul.f32 %v397, 0.6931472
        %v399 = vlog2.pop %v390
        %v400 = vmul.f32 %v399, 0.6931472
        %v401 = vlog2.pop %v393
        %v402 = vmul.f32 %v401, 0.6931472
        %v403 = vlog2.pop %v396
        %v404 = vmul.f32 %v403, 0.6931472
        %v405 = vsub.f32 %v337, %v398
        %v406 = vsub.f32 %v338, %v400
        %v407 = vsub.f32 %v339, %v402
        %v408 = vsub.f32 %v340, %v404
        %v409 = vsub.f32 %v341, %v398
        %v410 = vsub.f32 %v342, %v400
        %v411 = vsub.f32 %v343, %v402
        %v412 = vsub.f32 %v344, %v404
        %v413 = vsub.f32 %v345, %v398
        %v414 = vsub.f32 %v346, %v400
        %v415 = vsub.f32 %v347, %v402
        %v416 = vsub.f32 %v348, %v404
        %v417 = vsub.f32 %v349, %v398
        %v418 = vsub.f32 %v350, %v400
        %v419 = vsub.f32 %v351, %v402
        %v420 = vsub.f32 %v352, %v404
        %v421 = vld [vmem:[%s207] sm:$0xff]
        %v422 = vunpack.c.0.s8 %v421
        %v423 = vunpack.c.1.s8 %v421
        %v424 = vunpack.c.2.s8 %v421
        %v425 = vunpack.c.3.s8 %v421
        %vm426 = vcmp.eq.s32.totalorder %v422, 0
        %vm427 = vcmp.eq.s32.totalorder %v423, 0
        %vm428 = vcmp.eq.s32.totalorder %v424, 0
        %vm429 = vcmp.eq.s32.totalorder %v425, 0
        %v430 = vsel %vm426, %v405, 0.0
        %v431 = vsel %vm427, %v406, 0.0
        %v432 = vsel %vm428, %v407, 0.0
        %v433 = vsel %vm429, %v408, 0.0
        %v434 = vsub.f32 0.0, %v430
        %v435 = vsub.f32 0.0, %v431
        %v436 = vsub.f32 0.0, %v432
        %v437 = vsub.f32 0.0, %v433
        %vm438 = vcmp.eq.s32.totalorder %v422, 1
        %vm439 = vcmp.eq.s32.totalorder %v423, 1
        %vm440 = vcmp.eq.s32.totalorder %v424, 1
        %vm441 = vcmp.eq.s32.totalorder %v425, 1
        %v442 = vsel %vm438, %v409, 0.0
        %v443 = vsel %vm439, %v410, 0.0
        %v444 = vsel %vm440, %v411, 0.0
        %v445 = vsel %vm441, %v412, 0.0
        %v446 = vsub.f32 %v434, %v442
        %v447 = vsub.f32 %v435, %v443
        %v448 = vsub.f32 %v436, %v444
        %v449 = vsub.f32 %v437, %v445
        %vm450 = vcmp.eq.s32.totalorder %v422, 2
        %vm451 = vcmp.eq.s32.totalorder %v423, 2
        %vm452 = vcmp.eq.s32.totalorder %v424, 2
        %vm453 = vcmp.eq.s32.totalorder %v425, 2
        %v454 = vsel %vm450, %v413, 0.0
        %v455 = vsel %vm451, %v414, 0.0
        %v456 = vsel %vm452, %v415, 0.0
        %v457 = vsel %vm453, %v416, 0.0
        %v458 = vsub.f32 %v446, %v454
        %v459 = vsub.f32 %v447, %v455
        %v460 = vsub.f32 %v448, %v456
        %v461 = vsub.f32 %v449, %v457
        %vm462 = vcmp.eq.s32.totalorder %v422, 3
        %vm463 = vcmp.eq.s32.totalorder %v423, 3
        %vm464 = vcmp.eq.s32.totalorder %v424, 3
        %vm465 = vcmp.eq.s32.totalorder %v425, 3
        %v466 = vsel %vm462, %v417, 0.0
        %v467 = vsel %vm463, %v418, 0.0
        %v468 = vsel %vm464, %v419, 0.0
        %v469 = vsel %vm465, %v420, 0.0
        %v470 = vsub.f32 %v458, %v466
        %v471 = vsub.f32 %v459, %v467
        %v472 = vsub.f32 %v460, %v468
        %v473 = vsub.f32 %v461, %v469
        %v474 = vld [vmem:[%s232] sm:$0xff]
        %v475 = vadd.f32 %v470, %v471
        %v476 = vadd.f32 %v475, %v472
        %v477 = vadd.f32 %v476, %v473
        %v478 = vadd.f32 %v474, %v477
        %479 = vst [vmem:[%s232] sm:$0xff] %v478
        %s480 = sand.u32 %s111, 1
        %s481 = scalar_lea.sflag [#allocation4], %s480
        %s482 = sand.u32 %s111, 1
        %s483 = smul.addr %s482, 8
        %s484 = scalar_lea.vmem [#allocation7], %s483
        // Predicated region
        $region41: #{tpu_custom_call.1} parent=27 // pred_check
          %p485 = pneg %p121
        $region42: #{tpu_custom_call.1} parent=27 // pred_check_branch
          %487 = sbr.rel (%p485) target = $region44
        $region43: #{tpu_custom_call.1} parent=27 // pred_region
          %s489 = ssub.s32 128, 128
          %490 = vsyncadd %s481, %s489
          %s491 = sadd.s32 %s28, %s27
          %s492 = smul.addr %s491, 128
          %s493 = scalar_lea.hbm %s2, %s492
          %s495 = sshll.u32 %s484, 4
          %s496 = int_to_ptr.vmem [resolvable:$true] %s495
          %498 = dma.vmem_to_hbm [thread:$0]  %s496, 128, %s493, %s481
        $region44: #{tpu_custom_call.1} parent=27 // pred_fallthru
          _
      $region28: #{tpu_custom_call.1} parent=5 // pred_fallthru
        _
      %p499 = scmp.le.s32.totalorder 2, %s17
      // Predicated region
      $region45: #{tpu_custom_call.1} parent=5 // pred_check
        %p500 = pneg %p499
      $region46: #{tpu_custom_call.1} parent=5 // pred_check_branch
        %502 = sbr.rel (%p500) target = $region48
      $region47: #{tpu_custom_call.1} parent=5 // pred_region
        %s503 = ssub.s32 %s17, 2
        // Predicated region
        $region49: #{tpu_custom_call.1} parent=47 // pred_check
          %p504 = pneg %p127
        $region50: #{tpu_custom_call.1} parent=47 // pred_check_branch
          %506 = sbr.rel (%p504) target = $region52
        $region51: #{tpu_custom_call.1} parent=47 // pred_region
          %s507 = sand.u32 %s112, 1
          %s508 = scalar_lea.sflag [#allocation4], %s507
          %s509 = sand.u32 %s112, 1
          %s510 = smul.addr %s509, 8
          %s511 = scalar_lea.vmem [#allocation7], %s510
          %512 = dma.done %s508, 128
        $region52: #{tpu_custom_call.1} parent=47 // pred_fallthru
          _
      $region48: #{tpu_custom_call.1} parent=5 // pred_fallthru
        _
    $region6: #{tpu_custom_call.1} parent=1 // loop_footer
      %s21 = sadd.s32 1, %s17
    $region7: #{tpu_custom_call.1} parent=1 // loop_footer_branch
      %16 = sbr.rel target = $region3
    $region8: #{tpu_custom_call.1} parent=1 // loop_exit
      _
    %513 = vsyncpa [#allocation3], 1
    %s514 = scalar_lea.sflag [#allocation3], 1
    %515 = vsyncpa %s514, 1
    %516 = vsyncpa [#allocation6], 1
    %s517 = scalar_lea.sflag [#allocation6], 1
    %518 = vsyncpa %s517, 1
    %519 = vsyncpa [#allocation4], 1
    %s520 = scalar_lea.sflag [#allocation4], 1
    %521 = vsyncpa %s520, 1

</llo_original>
